<compile_context>
chip_gen: v5e
topology: v5e:2x2
jax: 0.10.0
libtpu: 0.0.40
codegen_flags: <defaults>
</compile_context>

<pallas_src>
import jax
import jax.numpy as jnp
from jax.experimental import pallas as pl
from jax.experimental.pallas import tpu as pltpu


def _fusion_gated_kernel(wt_ref, bt_ref, wv_ref, bv_ref, t_ref, v_ref, o_ref):
    """One (R, T) block: out = sigmoid(Wt@t + bt) * t + sigmoid(Wv@v + bv) * v.

    wt_ref / wv_ref : (R, R) block-diagonal weights, resident across the grid.
    bt_ref / bv_ref : (R, 1) float32 biases.
    t_ref / v_ref / o_ref : (R, T) feature blocks in the input dtype.
    """
    # ---- thermal branch: compute, fold into `out`, let zt die --------------
    t = t_ref[...]
    zt = jnp.dot(wt_ref[...], t, preferred_element_type=jnp.float32)
    zt = zt + bt_ref[...]
    # sigmoid(x) = 0.5 * tanh(0.5 * x) + 0.5  -> single EUP op, no VALU divide
    out = (0.5 * jnp.tanh(0.5 * zt) + 0.5) * t          # bf16 t promotes to f32

    # ---- visible branch -----------------------------------------------------
    v = v_ref[...]
    zv = jnp.dot(wv_ref[...], v, preferred_element_type=jnp.float32)
    zv = zv + bv_ref[...]
    out = out + (0.5 * jnp.tanh(0.5 * zv) + 0.5) * v

    o_ref[...] = out.astype(o_ref.dtype)


def _choose_row_block(n, c, cap=128):
    """Rows processed per grid step over the flattened (N*C, H*W) view.

    Constraints: R = NB*C with NB dividing N (row blocks never straddle a batch
    image and there are no ragged row blocks feeding the block-diag matmul),
    and R a multiple of 8 (sublane) unless it equals the full row extent.
    Prefers the largest such R <= cap (full sublane packing for tiny C without
    inflating the block-diagonal matmul work).
    """
    rows = n * c
    if rows <= cap:
        return rows
    good = [nb * c for nb in range(1, n + 1)
            if n % nb == 0 and (nb * c) % 8 == 0]
    small = [r for r in good if r <= cap]
    if small:
        return max(small)
    if good:
        return min(good)
    # TODO(synk): pathological shapes (huge N*C, C not 8-aligned, N with no
    # usable divisor) fall back to one full-height row block.
    return rows


def fusion_gated(feat_t, feat_v, w_t, b_t, w_v, b_v, *,
                 target_block_bytes=3 << 20):
    """feat_t, feat_v: NCHW.  w_*: (C_out, C_in) (= Conv2d weight[:, :, 0, 0]),
    b_*: (C_out,)."""
    N, C, H, W = feat_t.shape
    assert feat_v.shape == feat_t.shape
    HW = H * W
    rows = N * C
    dtype = feat_t.dtype
    itemsize = jnp.dtype(dtype).itemsize

    # Free, contiguous views: NCHW -> (N*C, H*W).
    t2 = feat_t.reshape(rows, HW)
    v2 = feat_v.reshape(rows, HW)

    # ---- row (sublane) blocking + block-diagonal weights --------------------
    R = _choose_row_block(N, C)
    NB = R // C
    eye = jnp.eye(NB, dtype=jnp.float32)
    wt_bd = jnp.kron(eye, w_t.astype(jnp.float32)).astype(dtype)      # (R, R)
    wv_bd = jnp.kron(eye, w_v.astype(jnp.float32)).astype(dtype)      # (R, R)
    bt_bd = jnp.tile(b_t.astype(jnp.float32).reshape(C, 1), (NB, 1))  # (R, 1)
    bv_bd = jnp.tile(b_v.astype(jnp.float32).reshape(C, 1), (NB, 1))  # (R, 1)

    # ---- lane (spatial) blocking: big, lane-dense blocks ---------------------
    t_lanes = max(128, target_block_bytes // (R * itemsize))
    if t_lanes >= HW or HW <= 128:
        T = HW                                        # full extent: always legal
    else:
        T = max(128, (min(t_lanes, HW) // 128) * 128)  # lane-dense tile

    n_row = rows // R
    n_col = pl.cdiv(HW, T)
    # Make sure both v7x TensorCores get work when the problem allows it.
    if n_row * n_col < 2 and HW >= 256:
        T = max(128, ((HW // 2) // 128) * 128)
        n_col = pl.cdiv(HW, T)
    grid = (n_row, n_col)

    # ---- VMEM budget: actual need (3 streams x 2 buffers + params), capped --
    feat_block_bytes = R * T * itemsize
    param_bytes = 2 * (R * R * itemsize) + 2 * (R * 4)
    vmem_need = 2 * 3 * feat_block_bytes + 2 * param_bytes
    vmem_limit = int(min(max(2 * vmem_need, 8 << 20), 40 << 20))

    out2 = pl.pallas_call(
        _fusion_gated_kernel,
        out_shape=jax.ShapeDtypeStruct((rows, HW), dtype),
        grid_spec=pltpu.PrefetchScalarGridSpec(
            num_scalar_prefetch=0,
            grid=grid,
            in_specs=[
                pl.BlockSpec((R, R), lambda i, j: (0, 0)),   # w_t (resident)
                pl.BlockSpec((R, 1), lambda i, j: (0, 0)),   # b_t
                pl.BlockSpec((R, R), lambda i, j: (0, 0)),   # w_v
                pl.BlockSpec((R, 1), lambda i, j: (0, 0)),   # b_v
                pl.BlockSpec((R, T), lambda i, j: (i, j)),   # feat_t block
                pl.BlockSpec((R, T), lambda i, j: (i, j)),   # feat_v block
            ],
            out_specs=pl.BlockSpec((R, T), lambda i, j: (i, j)),
        ),
        compiler_params=pltpu.CompilerParams(
            dimension_semantics=("parallel", "parallel"),
            vmem_limit_bytes=vmem_limit,
        ),
    )(wt_bd, bt_bd, wv_bd, bv_bd, t2, v2)

    return out2.reshape(N, C, H, W)


def _reference(feat_t, feat_v, w_t, b_t, w_v, b_v):
    """Plain-JAX f32 reference of the same math (1x1 conv as channel einsum)."""
    def conv1x1(x, w, b):
        y = jnp.einsum("nchw,dc->ndhw",
                       x.astype(jnp.float32), w.astype(jnp.float32),
                       precision=jax.lax.Precision.HIGHEST)
        return y + b.astype(jnp.float32)[None, :, None, None]

    t_gate = jax.nn.sigmoid(conv1x1(feat_t, w_t, b_t))
    v_gate = jax.nn.sigmoid(conv1x1(feat_v, w_v, b_v))
    return t_gate * feat_t.astype(jnp.float32) + v_gate * feat_v.astype(jnp.float32)


if __name__ == "__main__":
    def make_case(key, n, c, h, w, dtype):
        k1, k2, k3, k4, k5, k6 = jax.random.split(key, 6)
        ft = jax.random.normal(k1, (n, c, h, w), dtype=jnp.float32).astype(dtype)
        fv = jax.random.normal(k2, (n, c, h, w), dtype=jnp.float32).astype(dtype)
        wt = jax.random.normal(k3, (c, c), dtype=jnp.float32) * 0.1
        bt = jax.random.normal(k4, (c,), dtype=jnp.float32) * 0.1
        wv = jax.random.normal(k5, (c, c), dtype=jnp.float32) * 0.1
        bv = jax.random.normal(k6, (c,), dtype=jnp.float32) * 0.1
        return ft, fv, wt, bt, wv, bv

    key = jax.random.PRNGKey(0)

    # Case 1: the spec's nominal small shape (N=2, C=4, 16x16, f32).
    args1 = make_case(key, 2, 4, 16, 16, jnp.float32)
    out1 = jax.block_until_ready(fusion_gated(*args1))
    ref1 = _reference(*args1)
    assert out1.shape == (2, 4, 16, 16)
    assert jnp.allclose(out1, ref1, atol=5e-3, rtol=5e-3)

    # Case 2: larger C + spatial size that is not a multiple of the lane tile
    # (exercises the MXU channel-mix at bigger C and ragged last-lane masking).
    args2 = make_case(jax.random.fold_in(key, 1), 1, 32, 20, 20, jnp.float32)
    out2 = jax.block_until_ready(fusion_gated(*args2))
    ref2 = _reference(*args2)
    assert out2.shape == (1, 32, 20, 20)
    assert jnp.allclose(out2, ref2, atol=5e-3, rtol=5e-3)

    print("KERNEL_OK")
</pallas_src>

<mosaic_0001>
module attributes {stable_mosaic.version = 11 : i64} {
  func.func @_fusion_gated_kernel(%arg0: i32, %arg1: i32, %arg2: memref<8x8xf32, #tpu.memory_space<vmem>>, %arg3: memref<8x1xf32, #tpu.memory_space<vmem>>, %arg4: memref<8x8xf32, #tpu.memory_space<vmem>>, %arg5: memref<8x1xf32, #tpu.memory_space<vmem>>, %arg6: memref<8x128xf32, #tpu.memory_space<vmem>>, %arg7: memref<8x128xf32, #tpu.memory_space<vmem>>, %arg8: memref<8x128xf32, #tpu.memory_space<vmem>>) attributes {dimension_semantics = [#tpu.dimension_semantics<parallel>, #tpu.dimension_semantics<parallel>], iteration_bounds = array<i64: 1, 2>, scalar_prefetch = 0 : i64, scratch_operands = 0 : i64, tpu.core_type = #tpu.core_type<tc>, window_params = [{pipeline_mode = #tpu.pipeline_mode<synchronous>, transform_indices = @transform_0, window_bounds = array<i64: 8, 8>}, {pipeline_mode = #tpu.pipeline_mode<synchronous>, transform_indices = @transform_1, window_bounds = array<i64: 8, 1>}, {pipeline_mode = #tpu.pipeline_mode<synchronous>, transform_indices = @transform_2, window_bounds = array<i64: 8, 8>}, {pipeline_mode = #tpu.pipeline_mode<synchronous>, transform_indices = @transform_3, window_bounds = array<i64: 8, 1>}, {transform_indices = @transform_4, window_bounds = array<i64: 8, 128>}, {transform_indices = @transform_5, window_bounds = array<i64: 8, 128>}, {transform_indices = @transform_6, window_bounds = array<i64: 8, 128>}]} {
    %c0 = arith.constant 0 : index
    %c0_0 = arith.constant 0 : index
    %0 = vector.load %arg6[%c0, %c0_0] : memref<8x128xf32, #tpu.memory_space<vmem>>, vector<8x128xf32>
    %c0_1 = arith.constant 0 : index
    %c0_2 = arith.constant 0 : index
    %1 = vector.load %arg2[%c0_1, %c0_2] : memref<8x8xf32, #tpu.memory_space<vmem>>, vector<8x8xf32>
    %cst = arith.constant dense<0.000000e+00> : vector<8x128xf32>
    %2 = tpu.matmul %1, %0, %cst {dimension_numbers = #tpu.dot_dimension_numbers<[1], [0], [0], [1], [0, 0, 1, 1], [], []>} : vector<8x8xf32>, vector<8x128xf32>, vector<8x128xf32> -> vector<8x128xf32>
    %c0_3 = arith.constant 0 : index
    %c0_4 = arith.constant 0 : index
    %3 = vector.load %arg3[%c0_3, %c0_4] : memref<8x1xf32, #tpu.memory_space<vmem>>, vector<8x1xf32>
    %4 = vector.broadcast %3 : vector<8x1xf32> to vector<8x128xf32>
    %5 = arith.addf %2, %4 : vector<8x128xf32>
    %cst_5 = arith.constant 5.000000e-01 : f32
    %6 = vector.broadcast %cst_5 : f32 to vector<8x128xf32>
    %7 = arith.mulf %6, %5 : vector<8x128xf32>
    %8 = math.tanh %7 : vector<8x128xf32>
    %cst_6 = arith.constant 5.000000e-01 : f32
    %9 = vector.broadcast %cst_6 : f32 to vector<8x128xf32>
    %10 = arith.mulf %9, %8 : vector<8x128xf32>
    %cst_7 = arith.constant 5.000000e-01 : f32
    %11 = vector.broadcast %cst_7 : f32 to vector<8x128xf32>
    %12 = arith.addf %10, %11 : vector<8x128xf32>
    %13 = arith.mulf %12, %0 : vector<8x128xf32>
    %c0_8 = arith.constant 0 : index
    %c0_9 = arith.constant 0 : index
    %14 = vector.load %arg7[%c0_8, %c0_9] : memref<8x128xf32, #tpu.memory_space<vmem>>, vector<8x128xf32>
    %c0_10 = arith.constant 0 : index
    %c0_11 = arith.constant 0 : index
    %15 = vector.load %arg4[%c0_10, %c0_11] : memref<8x8xf32, #tpu.memory_space<vmem>>, vector<8x8xf32>
    %cst_12 = arith.constant dense<0.000000e+00> : vector<8x128xf32>
    %16 = tpu.matmul %15, %14, %cst_12 {dimension_numbers = #tpu.dot_dimension_numbers<[1], [0], [0], [1], [0, 0, 1, 1], [], []>} : vector<8x8xf32>, vector<8x128xf32>, vector<8x128xf32> -> vector<8x128xf32>
    %c0_13 = arith.constant 0 : index
    %c0_14 = arith.constant 0 : index
    %17 = vector.load %arg5[%c0_13, %c0_14] : memref<8x1xf32, #tpu.memory_space<vmem>>, vector<8x1xf32>
    %18 = vector.broadcast %17 : vector<8x1xf32> to vector<8x128xf32>
    %19 = arith.addf %16, %18 : vector<8x128xf32>
    %cst_15 = arith.constant 5.000000e-01 : f32
    %20 = vector.broadcast %cst_15 : f32 to vector<8x128xf32>
    %21 = arith.mulf %20, %19 : vector<8x128xf32>
    %22 = math.tanh %21 : vector<8x128xf32>
    %cst_16 = arith.constant 5.000000e-01 : f32
    %23 = vector.broadcast %cst_16 : f32 to vector<8x128xf32>
    %24 = arith.mulf %23, %22 : vector<8x128xf32>
    %cst_17 = arith.constant 5.000000e-01 : f32
    %25 = vector.broadcast %cst_17 : f32 to vector<8x128xf32>
    %26 = arith.addf %24, %25 : vector<8x128xf32>
    %27 = arith.mulf %26, %14 : vector<8x128xf32>
    %28 = arith.addf %13, %27 : vector<8x128xf32>
    %c0_18 = arith.constant 0 : index
    %c0_19 = arith.constant 0 : index
    %29 = vector.load %arg8[%c0_18, %c0_19] : memref<8x128xf32, #tpu.memory_space<vmem>>, vector<8x128xf32>
    tpu.vector_store %arg8[%c0_18, %c0_19], %28 {strides = array<i32>} : memref<8x128xf32, #tpu.memory_space<vmem>>, vector<8x128xf32>,
    return
  }
  func.func @transform_0(%arg0: i32, %arg1: i32) -> (i32, i32) {
    %c0_i32 = arith.constant 0 : i32
    %c0_i32_0 = arith.constant 0 : i32
    %c0_i32_1 = arith.constant 0 : i32
    return %c0_i32, %c0_i32_0 : i32, i32
  }
  func.func @transform_1(%arg0: i32, %arg1: i32) -> (i32, i32) {
    %c0_i32 = arith.constant 0 : i32
    %c0_i32_0 = arith.constant 0 : i32
    %c0_i32_1 = arith.constant 0 : i32
    return %c0_i32, %c0_i32_0 : i32, i32
  }
  func.func @transform_2(%arg0: i32, %arg1: i32) -> (i32, i32) {
    %c0_i32 = arith.constant 0 : i32
    %c0_i32_0 = arith.constant 0 : i32
    %c0_i32_1 = arith.constant 0 : i32
    return %c0_i32, %c0_i32_0 : i32, i32
  }
  func.func @transform_3(%arg0: i32, %arg1: i32) -> (i32, i32) {
    %c0_i32 = arith.constant 0 : i32
    %c0_i32_0 = arith.constant 0 : i32
    %c0_i32_1 = arith.constant 0 : i32
    return %c0_i32, %c0_i32_0 : i32, i32
  }
  func.func @transform_4(%arg0: i32, %arg1: i32) -> (i32, i32) {
    %c0_i32 = arith.constant 0 : i32
    return %arg0, %arg1 : i32, i32
  }
  func.func @transform_5(%arg0: i32, %arg1: i32) -> (i32, i32) {
    %c0_i32 = arith.constant 0 : i32
    return %arg0, %arg1 : i32, i32
  }
  func.func @transform_6(%arg0: i32, %arg1: i32) -> (i32, i32) {
    %c0_i32 = arith.constant 0 : i32
    return %arg0, %arg1 : i32, i32
  }
}

</mosaic_0001>

<llo_original>
// kernel: tpu_custom_call.1
$region0: #{tpu_custom_call.1}
  #allocation0 [shape = 'u32[]', space=smem, size = 0x4, offset = 0x4, fixed_abs, tag = 'smem constant byte address 0x4 - core index']
  #allocation1 [shape = 'u32[72,128]{1,0:T(1,128)}', space=vmem, size = 0x9000, scoped, tag = 'internal scratch']
  %s0 = inlined_call_operand.hbm [shape: f32[8,8], index: 0, kind: input, shape index: {}]
  %s1 = inlined_call_operand.vmem [shape: f32[8,1], index: 1, kind: input, shape index: {}]
  %s2 = inlined_call_operand.hbm [shape: f32[8,8], index: 2, kind: input, shape index: {}]
  %s3 = inlined_call_operand.vmem [shape: f32[8,1], index: 3, kind: input, shape index: {}]
  %s4 = inlined_call_operand.vmem [shape: f32[8,256], index: 4, kind: input, shape index: {}]
  %s5 = inlined_call_operand.hbm [shape: f32[8,256], index: 5, kind: input, shape index: {}]
  %s6 = inlined_call_operand.hbm [shape: f32[8,256], index: 6, kind: output, shape index: {}]
  %s7 = sld [smem:[#allocation0]]
  $region69: #{tpu_custom_call.1} parent=0
    _
  %s9 = ssub.s32 1, %s7
  %s10 = scalar_select 0, %s9, %s7
  $region1: #{tpu_custom_call.1} parent=0
    #allocation2 [shape = 'u8[4096]{0}', space=vmem, size = 0x1000, scoped, tag = 'input window, operand 0, single buffered']
    #allocation3 [shape = 's32[2]{0}', space=sflag, size = 0x8, scoped, tag = 'scoped memory for tpu_custom_call.1']
    #allocation4 [shape = 's32[2]{0}', space=sflag, size = 0x8, scoped, tag = 'scoped memory for tpu_custom_call.1']
    #allocation5 [shape = 'u8[4096]{0}', space=vmem, size = 0x1000, scoped, tag = 'input window, operand 2, single buffered']
    #allocation6 [shape = 's32[1]{0}', space=sflag, size = 0x4, scoped, tag = 'scoped memory for tpu_custom_call.1']
    #allocation7 [shape = 'u8[8192]{0}', space=vmem, size = 0x2000, scoped, tag = 'input window, operand 5']
    #allocation8 [shape = 'u8[8192]{0}', space=vmem, size = 0x2000, scoped, tag = 'output window, operand 0']
    %11 = vsyncpa [#allocation3], 0
    %12 = vsyncpa [#allocation6], 0
    %13 = vsyncpa [#allocation4], 0
    %s14 = scalar_lea.sflag [#allocation4], 1
    %15 = vsyncpa %s14, 0
    loop: start=0, step=1, limit=4
    $region2: #{tpu_custom_call.1} parent=1 // loop_pre_header
      _
    $region3: #{tpu_custom_call.1} parent=1 // loop_header
      %s17 = sphi 0, %s21
      %p18 = scmp.ge.s32.totalorder %s17, 4
      %s24 = sphi 0, %s36
      %s25 = sphi 0, %s32
      %s26 = sphi 0, %s24
      %s27 = sphi 0, %s25
      %s28 = sphi 0, %s26
      %s29 = sphi 0, %s27
      %s37 = sphi 0, %s37
      %s39 = sphi 0, %s37
      %s40 = sphi 0, %s39
      %s54 = sphi 0, %s40
      %s58 = sphi 0, %s58
      %s60 = sphi 0, %s58
      %s61 = sphi 0, %s60
      %s75 = sphi 0, %s61
      %s79 = sphi 0, %s79
      %s81 = sphi 0, %s79
      %s82 = sphi 0, %s81
      %s96 = sphi 0, %s82
      %s100 = sphi 0, %s100
      %s102 = sphi 0, %s100
      %s103 = sphi 0, %s102
      %s117 = sphi 0, %s103
      %s125 = sphi 0, %s127
      %s128 = sphi 0, %s125
      %s129 = sphi 0, %s128
      %s145 = sphi 0, %s129
      %s153 = sphi 0, %s155
      %s156 = sphi 0, %s153
      %s157 = sphi 0, %s156
      %s173 = sphi 0, %s157
      %s181 = sphi 0, %s183
      %s184 = sphi 0, %s181
      %s185 = sphi 0, %s184
      %s201 = sphi 0, %s185
    $region4: #{tpu_custom_call.1} parent=1 // loop_header_branch
      %20 = sbr.rel (%p18) target = $region8
    $region5: #{tpu_custom_call.1} parent=1 // loop_body
      %s22 = ssub.s32 %s17, 1
      %s23 = ssub.s32 %s17, 2
      %s30 = sadd.s32 1, %s25
      %p31 = scmp.ge.s32.totalorder %s30, 2
      %s32 = scalar_select %p31, 0, %s30
      %s33 = sadd.s32 1, %s24
      %s34 = scalar_select %p31, %s33, %s24
      %p35 = scmp.ge.s32.totalorder %s34, 1
      %s36 = scalar_select %p35, 0, %s34
      %s38 = sadd.s32 %s37, 1
      %p41 = scmp.eq.s32.totalorder %s17, 1
      %p42 = scmp.ne.s32.totalorder %s37, %s39
      %p43 = scmp.eq.s32.totalorder %s17, 0
      %p44 = por %p42, %p43
      %p45 = scmp.ne.s32.totalorder %s37, %s39
      %p46 = scmp.eq.s32.totalorder %s22, 1
      %p47 = por %p45, %p46
      %p48 = scmp.ne.s32.totalorder %s39, %s40
      %p49 = scmp.eq.s32.totalorder %s22, 0
      %p50 = por %p48, %p49
      %p51 = scmp.ne.s32.totalorder %s39, %s40
      %p52 = scmp.eq.s32.totalorder %s23, 1
      %p53 = por %p51, %p52
      %p55 = scmp.ne.s32.totalorder %s40, %s54
      %p56 = scmp.eq.s32.totalorder %s23, 0
      %p57 = por %p55, %p56
      %s59 = sadd.s32 %s58, 1
      %p62 = scmp.eq.s32.totalorder %s17, 1
      %p63 = scmp.ne.s32.totalorder %s58, %s60
      %p64 = scmp.eq.s32.totalorder %s17, 0
      %p65 = por %p63, %p64
      %p66 = scmp.ne.s32.totalorder %s58, %s60
      %p67 = scmp.eq.s32.totalorder %s22, 1
      %p68 = por %p66, %p67
      %p69 = scmp.ne.s32.totalorder %s60, %s61
      %p70 = scmp.eq.s32.totalorder %s22, 0
      %p71 = por %p69, %p70
      %p72 = scmp.ne.s32.totalorder %s60, %s61
      %p73 = scmp.eq.s32.totalorder %s23, 1
      %p74 = por %p72, %p73
      %p76 = scmp.ne.s32.totalorder %s61, %s75
      %p77 = scmp.eq.s32.totalorder %s23, 0
      %p78 = por %p76, %p77
      %s80 = sadd.s32 %s79, 1
      %p83 = scmp.eq.s32.totalorder %s17, 1
      %p84 = scmp.ne.s32.totalorder %s79, %s81
      %p85 = scmp.eq.s32.totalorder %s17, 0
      %p86 = por %p84, %p85
      %p87 = scmp.ne.s32.totalorder %s79, %s81
      %p88 = scmp.eq.s32.totalorder %s22, 1
      %p89 = por %p87, %p88
      %p90 = scmp.ne.s32.totalorder %s81, %s82
      %p91 = scmp.eq.s32.totalorder %s22, 0
      %p92 = por %p90, %p91
      %p93 = scmp.ne.s32.totalorder %s81, %s82
      %p94 = scmp.eq.s32.totalorder %s23, 1
      %p95 = por %p93, %p94
      %p97 = scmp.ne.s32.totalorder %s82, %s96
      %p98 = scmp.eq.s32.totalorder %s23, 0
      %p99 = por %p97, %p98
      %s101 = sadd.s32 %s100, 1
      %p104 = scmp.eq.s32.totalorder %s17, 1
      %p105 = scmp.ne.s32.totalorder %s100, %s102
      %p106 = scmp.eq.s32.totalorder %s17, 0
      %p107 = por %p105, %p106
      %p108 = scmp.ne.s32.totalorder %s100, %s102
      %p109 = scmp.eq.s32.totalorder %s22, 1
      %p110 = por %p108, %p109
      %p111 = scmp.ne.s32.totalorder %s102, %s103
      %p112 = scmp.eq.s32.totalorder %s22, 0
      %p113 = por %p111, %p112
      %p114 = scmp.ne.s32.totalorder %s102, %s103
      %p115 = scmp.eq.s32.totalorder %s23, 1
      %p116 = por %p114, %p115
      %p118 = scmp.ne.s32.totalorder %s103, %s117
      %p119 = scmp.eq.s32.totalorder %s23, 0
      %p120 = por %p118, %p119
      %s121 = ssub.s32 %s24, %s36
      %s122 = ssub.s32 %s25, %s32
      %s123 = sor.u32 %s121, %s122
      %p124 = scmp.eq.s32.totalorder %s123, 0
      %s126 = sadd.s32 %s125, 1
      %s127 = scalar_select %p124, %s125, %s126
      %p130 = pneg %p124
      %p131 = scmp.eq.s32.totalorder %s17, 1
      %p132 = por %p130, %p131
      %p133 = scmp.ne.s32.totalorder %s125, %s128
      %p134 = scmp.eq.s32.totalorder %s17, 0
      %p135 = por %p133, %p134
      %p136 = scmp.ne.s32.totalorder %s125, %s128
      %p137 = scmp.eq.s32.totalorder %s22, 1
      %p138 = por %p136, %p137
      %p139 = scmp.ne.s32.totalorder %s128, %s129
      %p140 = scmp.eq.s32.totalorder %s22, 0
      %p141 = por %p139, %p140
      %p142 = scmp.ne.s32.totalorder %s128, %s129
      %p143 = scmp.eq.s32.totalorder %s23, 1
      %p144 = por %p142, %p143
      %p146 = scmp.ne.s32.totalorder %s129, %s145
      %p147 = scmp.eq.s32.totalorder %s23, 0
      %p148 = por %p146, %p147
      %s149 = ssub.s32 %s24, %s36
      %s150 = ssub.s32 %s25, %s32
      %s151 = sor.u32 %s149, %s150
      %p152 = scmp.eq.s32.totalorder %s151, 0
      %s154 = sadd.s32 %s153, 1
      %s155 = scalar_select %p152, %s153, %s154
      %p158 = pneg %p152
      %p159 = scmp.eq.s32.totalorder %s17, 1
      %p160 = por %p158, %p159
      %p161 = scmp.ne.s32.totalorder %s153, %s156
      %p162 = scmp.eq.s32.totalorder %s17, 0
      %p163 = por %p161, %p162
      %p164 = scmp.ne.s32.totalorder %s153, %s156
      %p165 = scmp.eq.s32.totalorder %s22, 1
      %p166 = por %p164, %p165
      %p167 = scmp.ne.s32.totalorder %s156, %s157
      %p168 = scmp.eq.s32.totalorder %s22, 0
      %p169 = por %p167, %p168
      %p170 = scmp.ne.s32.totalorder %s156, %s157
      %p171 = scmp.eq.s32.totalorder %s23, 1
      %p172 = por %p170, %p171
      %p174 = scmp.ne.s32.totalorder %s157, %s173
      %p175 = scmp.eq.s32.totalorder %s23, 0
      %p176 = por %p174, %p175
      %s177 = ssub.s32 %s24, %s36
      %s178 = ssub.s32 %s25, %s32
      %s179 = sor.u32 %s177, %s178
      %p180 = scmp.eq.s32.totalorder %s179, 0
      %s182 = sadd.s32 %s181, 1
      %s183 = scalar_select %p180, %s181, %s182
      %p186 = pneg %p180
      %p187 = scmp.eq.s32.totalorder %s17, 1
      %p188 = por %p186, %p187
      %p189 = scmp.ne.s32.totalorder %s181, %s184
      %p190 = scmp.eq.s32.totalorder %s17, 0
      %p191 = por %p189, %p190
      %p192 = scmp.ne.s32.totalorder %s181, %s184
      %p193 = scmp.eq.s32.totalorder %s22, 1
      %p194 = por %p192, %p193
      %p195 = scmp.ne.s32.totalorder %s184, %s185
      %p196 = scmp.eq.s32.totalorder %s22, 0
      %p197 = por %p195, %p196
      %p198 = scmp.ne.s32.totalorder %s184, %s185
      %p199 = scmp.eq.s32.totalorder %s23, 1
      %p200 = por %p198, %p199
      %p202 = scmp.ne.s32.totalorder %s185, %s201
      %p203 = scmp.eq.s32.totalorder %s23, 0
      %p204 = por %p202, %p203
      %p205 = scmp.le.s32.totalorder 1, %s17
      %p206 = scmp.lt.s32.totalorder %s17, 3
      %p207 = pnand %p205, %p206
      %p208 = pneg %p207
      // Predicated region
      $region9: #{tpu_custom_call.1} parent=5 // pred_check
        _
      $region10: #{tpu_custom_call.1} parent=5 // pred_check_branch
        %210 = sbr.rel (%p207) target = $region12
      $region11: #{tpu_custom_call.1} parent=5 // pred_region
        %s211 = ssub.s32 %s17, 1
        // Predicated region
        $region13: #{tpu_custom_call.1} parent=11 // pred_check
          %p212 = pneg %p50
        $region14: #{tpu_custom_call.1} parent=11 // pred_check_branch
          %214 = sbr.rel (%p212) target = $region16
        $region15: #{tpu_custom_call.1} parent=11 // pred_region
          %216 = vsyncadd [#allocation3], 0
          %s218 = sshll.u32 %s0, 4
          %s219 = int_to_ptr.hbm [resolvable:$true] %s218
          %s220 = sshll.u32 [#allocation2], 4
          %s221 = int_to_ptr.vmem [resolvable:$true] %s220
          %223 = dma.hbm_to_vmem [thread:$0]  %s219, 128, %s221, [#allocation3]
        $region16: #{tpu_custom_call.1} parent=11 // pred_fallthru
          _
        // Predicated region
        $region17: #{tpu_custom_call.1} parent=11 // pred_check
          %p224 = pneg %p71
        $region18: #{tpu_custom_call.1} parent=11 // pred_check_branch
          %226 = sbr.rel (%p224) target = $region20
        $region19: #{tpu_custom_call.1} parent=11 // pred_region
          _
        $region20: #{tpu_custom_call.1} parent=11 // pred_fallthru
          _
        // Predicated region
        $region21: #{tpu_custom_call.1} parent=11 // pred_check
          %p227 = pneg %p92
        $region22: #{tpu_custom_call.1} parent=11 // pred_check_branch
          %229 = sbr.rel (%p227) target = $region24
        $region23: #{tpu_custom_call.1} parent=11 // pred_region
          %231 = vsyncadd [#allocation6], 0
          %s233 = sshll.u32 %s2, 4
          %s234 = int_to_ptr.hbm [resolvable:$true] %s233
          %s235 = sshll.u32 [#allocation5], 4
          %s236 = int_to_ptr.vmem [resolvable:$true] %s235
          %238 = dma.hbm_to_vmem [thread:$0]  %s234, 128, %s236, [#allocation6]
        $region24: #{tpu_custom_call.1} parent=11 // pred_fallthru
          _
        // Predicated region
        $region25: #{tpu_custom_call.1} parent=11 // pred_check
          %p239 = pneg %p113
        $region26: #{tpu_custom_call.1} parent=11 // pred_check_branch
          %241 = sbr.rel (%p239) target = $region28
        $region27: #{tpu_custom_call.1} parent=11 // pred_region
          _
        $region28: #{tpu_custom_call.1} parent=11 // pred_fallthru
          _
      $region12: #{tpu_custom_call.1} parent=5 // pred_fallthru
        _
      %p242 = scmp.lt.s32.totalorder %s17, 2
      // Predicated region
      $region29: #{tpu_custom_call.1} parent=5 // pred_check
        %p243 = pneg %p242
      $region30: #{tpu_custom_call.1} parent=5 // pred_check_branch
        %245 = sbr.rel (%p243) target = $region32
      $region31: #{tpu_custom_call.1} parent=5 // pred_region
        // Predicated region
        $region33: #{tpu_custom_call.1} parent=31 // pred_check
          %p246 = pneg %p135
        $region34: #{tpu_custom_call.1} parent=31 // pred_check_branch
          %248 = sbr.rel (%p246) target = $region36
        $region35: #{tpu_custom_call.1} parent=31 // pred_region
          %p249 = scmp.lt.s32.totalorder %s24, 0
          %s250 = scalar_select %p249, %s24, 0
          %p251 = scmp.lt.s32.totalorder %s25, 1
          %s252 = scalar_select %p251, %s25, 1
          %s253 = smul.addr %s250, 2
          %s254 = sadd.s32 %s252, %s253
          %s255 = smul.addr %s254, 8
          %s256 = scalar_lea.vmem %s4, %s255
        $region36: #{tpu_custom_call.1} parent=31 // pred_fallthru
          _
        // Predicated region
        $region37: #{tpu_custom_call.1} parent=31 // pred_check
          %p257 = pneg %p163
        $region38: #{tpu_custom_call.1} parent=31 // pred_check_branch
          %259 = sbr.rel (%p257) target = $region40
        $region39: #{tpu_custom_call.1} parent=31 // pred_region
          %s260 = sand.u32 %s17, 1
          %s261 = scalar_lea.sflag [#allocation3], %s260
          %s262 = sand.u32 %s153, 1
          %s263 = smul.addr %s262, 8
          %s264 = scalar_lea.vmem [#allocation7], %s263
          %266 = vsyncadd %s261, 0
          %s267 = smul.addr %s24, 2
          %s268 = sadd.s32 %s25, %s267
          %s269 = smul.addr %s268, 8
          %s270 = scalar_lea.hbm %s5, %s269
          %s272 = sshll.u32 %s270, 4
          %s273 = int_to_ptr.hbm [resolvable:$true] %s272
          %s274 = sshll.u32 %s264, 4
          %s275 = int_to_ptr.vmem [resolvable:$true] %s274
          %277 = dma.hbm_to_vmem [thread:$0]  %s273, 128, %s275, %s261
        $region40: #{tpu_custom_call.1} parent=31 // pred_fallthru
          _
      $region32: #{tpu_custom_call.1} parent=5 // pred_fallthru
        _
      %p278 = scmp.le.s32.totalorder 1, %s17
      %p279 = scmp.lt.s32.totalorder %s17, 3
      %p280 = pnand %p278, %p279
      %p281 = pneg %p280
      // Predicated region
      $region41: #{tpu_custom_call.1} parent=5 // pred_check
        _
      $region42: #{tpu_custom_call.1} parent=5 // pred_check_branch
        %283 = sbr.rel (%p280) target = $region44
      $region43: #{tpu_custom_call.1} parent=5 // pred_region
        %s284 = ssub.s32 %s17, 1
        // Predicated region
        $region45: #{tpu_custom_call.1} parent=43 // pred_check
          %p285 = pneg %p50
        $region46: #{tpu_custom_call.1} parent=43 // pred_check_branch
          %287 = sbr.rel (%p285) target = $region48
        $region47: #{tpu_custom_call.1} parent=43 // pred_region
          %289 = dma.done [#allocation3], 128
        $region48: #{tpu_custom_call.1} parent=43 // pred_fallthru
          _
        // Predicated region
        $region49: #{tpu_custom_call.1} parent=43 // pred_check
          %p290 = pneg %p92
        $region50: #{tpu_custom_call.1} parent=43 // pred_check_branch
          %292 = sbr.rel (%p290) target = $region52
        $region51: #{tpu_custom_call.1} parent=43 // pred_region
          %294 = dma.done [#allocation6], 128
        $region52: #{tpu_custom_call.1} parent=43 // pred_fallthru
          _
        %s295 = sand.u32 %s22, 1
        %s296 = scalar_lea.sflag [#allocation3], %s295
        %s297 = sand.u32 %s156, 1
        %s298 = smul.addr %s297, 8
        %s299 = scalar_lea.vmem [#allocation7], %s298
        // Predicated region
        $region53: #{tpu_custom_call.1} parent=43 // pred_check
          %p300 = pneg %p169
        $region54: #{tpu_custom_call.1} parent=43 // pred_check_branch
          %302 = sbr.rel (%p300) target = $region56
        $region55: #{tpu_custom_call.1} parent=43 // pred_region
          %304 = dma.done %s296, 128
        $region56: #{tpu_custom_call.1} parent=43 // pred_fallthru
          _
        %p305 = pneg %p50
        %p306 = pneg %p47
        %p307 = pneg %p71
        %p308 = pneg %p68
        %p309 = pneg %p92
        %p310 = pneg %p89
        %p311 = pneg %p113
        %p312 = pneg %p110
        %p313 = scmp.lt.s32.totalorder %s26, 0
        %s314 = scalar_select %p313, %s26, 0
        %p315 = scmp.lt.s32.totalorder %s27, 1
        %s316 = scalar_select %p315, %s27, 1
        %s317 = smul.addr %s314, 2
        %s318 = sadd.s32 %s316, %s317
        %s319 = smul.addr %s318, 8
        %s320 = scalar_lea.vmem %s4, %s319
        %p321 = pneg %p141
        %p322 = pneg %p138
        %s323 = sand.u32 %s22, 1
        %s324 = scalar_lea.sflag [#allocation3], %s323
        %s325 = sand.u32 %s156, 1
        %s326 = smul.addr %s325, 8
        %s327 = scalar_lea.vmem [#allocation7], %s326
        %p328 = pneg %p169
        %p329 = pneg %p166
        %p330 = pneg %p197
        %p331 = pneg %p194
        %s332 = sand.u32 %s184, 1
        %s333 = scalar_lea.sflag [#allocation4], %s332
        %s334 = sand.u32 %s184, 1
        %s335 = smul.addr %s334, 8
        %s336 = scalar_lea.vmem [#allocation8], %s335
        %p337 = scmp.lt.s32.totalorder %s26, 0
        %s338 = scalar_select %p337, %s26, 0
        %p339 = scmp.lt.s32.totalorder %s27, 1
        %s340 = scalar_select %p339, %s27, 1
        %s341 = smul.addr %s338, 2
        %s342 = sadd.s32 %s340, %s341
        %s343 = smul.addr %s342, 8
        %s344 = scalar_lea.vmem %s4, %s343
        %v345 = vld [vmem:[%s344] sm:$0xff]
        %v346 = vld [vmem:[#allocation2] sm:$0xff]
        %v347 = vld [vmem:[%s1] sm:$0xff]
        %349 = vset.pattern.permute.xlu0 0
        %350 = vperm.xlu0 %349, %v347
        %v351 = vpop.permute.xlu0 %350
        %vm353 = vcmask 64512
        %v355 = vsel %vm353, %v346, 0
        %357 = vmatpush.msra.mxu0 0.0
        %358 = vmatpush.msra.mxu0 0.0
        %359 = vmatpush.msra.mxu0 0.0
        %360 = vmatpush.msra.mxu0 0.0
        %361 = vmatpush.msra.mxu0 0.0
        %362 = vmatpush.msra.mxu0 0.0
        %363 = vmatpush.msra.mxu0 0.0
        %364 = vmatpush.msra.mxu0 0.0
        %365 = vmatpush.msra.mxu0 0.0
        %366 = vmatpush.msra.mxu0 0.0
        %367 = vmatpush.msra.mxu0 0.0
        %368 = vmatpush.msra.mxu0 0.0
        %369 = vmatpush.msra.mxu0 0.0
        %370 = vmatpush.msra.mxu0 0.0
        %371 = vmatpush.msra.mxu0 0.0
        %372 = vmatpush.msra.mxu0 %v345
        %373 = vmatmul.f32.gmra.mxu0 %v355
        %v374 = vpop.f32.mrf.mxu0
        %v375 = vadd.f32 %v351, %v374
        %376 = vdwg.mxu0
        %v377 = vmul.f32 %v375, 0.5
        %v378 = vtanh.pop %v377
        %v379 = vmul.f32 %v378, 0.5
        %v380 = vadd.f32 %v379, 0.5
        %v381 = vmul.f32 %v380, %v345
        %v382 = vld [vmem:[%s299] sm:$0xff]
        %v383 = vld [vmem:[#allocation5] sm:$0xff]
        %v384 = vld [vmem:[%s3] sm:$0xff]
        %386 = vset.pattern.permute.xlu0 0
        %387 = vperm.xlu0 %386, %v384
        %v388 = vpop.permute.xlu0 %387
        %v391 = vsel %vm353, %v383, 0
        %393 = vmatpush.msra.mxu0 0.0
        %394 = vmatpush.msra.mxu0 0.0
        %395 = vmatpush.msra.mxu0 0.0
        %396 = vmatpush.msra.mxu0 0.0
        %397 = vmatpush.msra.mxu0 0.0
        %398 = vmatpush.msra.mxu0 0.0
        %399 = vmatpush.msra.mxu0 0.0
        %400 = vmatpush.msra.mxu0 0.0
        %401 = vmatpush.msra.mxu0 0.0
        %402 = vmatpush.msra.mxu0 0.0
        %403 = vmatpush.msra.mxu0 0.0
        %404 = vmatpush.msra.mxu0 0.0
        %405 = vmatpush.msra.mxu0 0.0
        %406 = vmatpush.msra.mxu0 0.0
        %407 = vmatpush.msra.mxu0 0.0
        %408 = vmatpush.msra.mxu0 %v382
        %409 = vmatmul.f32.gmra.mxu0 %v391
        %v410 = vpop.f32.mrf.mxu0
        %v411 = vadd.f32 %v388, %v410
        %412 = vdwg.mxu0
        %v413 = vmul.f32 %v411, 0.5
        %v414 = vtanh.pop %v413
        %v415 = vmul.f32 %v414, 0.5
        %v416 = vadd.f32 %v415, 0.5
        %v417 = vmul.f32 %v416, %v382
        %v418 = vadd.f32 %v381, %v417
        %419 = vst [vmem:[%s336] sm:$0xff] %v418
        %s420 = sand.u32 %s184, 1
        %s421 = scalar_lea.sflag [#allocation4], %s420
        %s422 = sand.u32 %s184, 1
        %s423 = smul.addr %s422, 8
        %s424 = scalar_lea.vmem [#allocation8], %s423
        // Predicated region
        $region57: #{tpu_custom_call.1} parent=43 // pred_check
          %p425 = pneg %p194
        $region58: #{tpu_custom_call.1} parent=43 // pred_check_branch
          %427 = sbr.rel (%p425) target = $region60
        $region59: #{tpu_custom_call.1} parent=43 // pred_region
          %429 = vsyncadd %s421, 0
          %s430 = smul.addr %s26, 2
          %s431 = sadd.s32 %s27, %s430
          %s432 = smul.addr %s431, 8
          %s433 = scalar_lea.hbm %s6, %s432
          %s435 = sshll.u32 %s424, 4
          %s436 = int_to_ptr.vmem [resolvable:$true] %s435
          %s437 = sshll.u32 %s433, 4
          %s438 = int_to_ptr.hbm [resolvable:$true] %s437
          %440 = dma.vmem_to_hbm [thread:$0]  %s436, 128, %s438, %s421
        $region60: #{tpu_custom_call.1} parent=43 // pred_fallthru
          _
      $region44: #{tpu_custom_call.1} parent=5 // pred_fallthru
        _
      %p441 = scmp.le.s32.totalorder 2, %s17
      // Predicated region
      $region61: #{tpu_custom_call.1} parent=5 // pred_check
        %p442 = pneg %p441
      $region62: #{tpu_custom_call.1} parent=5 // pred_check_branch
        %444 = sbr.rel (%p442) target = $region64
      $region63: #{tpu_custom_call.1} parent=5 // pred_region
        %s445 = ssub.s32 %s17, 2
        // Predicated region
        $region65: #{tpu_custom_call.1} parent=63 // pred_check
          %p446 = pneg %p200
        $region66: #{tpu_custom_call.1} parent=63 // pred_check_branch
          %448 = sbr.rel (%p446) target = $region68
        $region67: #{tpu_custom_call.1} parent=63 // pred_region
          %s449 = sand.u32 %s185, 1
          %s450 = scalar_lea.sflag [#allocation4], %s449
          %s451 = sand.u32 %s185, 1
          %s452 = smul.addr %s451, 8
          %s453 = scalar_lea.vmem [#allocation8], %s452
          %455 = dma.done %s450, 128
        $region68: #{tpu_custom_call.1} parent=63 // pred_fallthru
          _
      $region64: #{tpu_custom_call.1} parent=5 // pred_fallthru
        _
    $region6: #{tpu_custom_call.1} parent=1 // loop_footer
      %s21 = sadd.s32 1, %s17
    $region7: #{tpu_custom_call.1} parent=1 // loop_footer_branch
      %16 = sbr.rel target = $region3
    $region8: #{tpu_custom_call.1} parent=1 // loop_exit
      _
    %456 = vsyncpa [#allocation3], 1
    %s457 = scalar_lea.sflag [#allocation3], 1
    %458 = vsyncpa %s457, 1
    %459 = vsyncpa [#allocation6], 1
    %460 = vsyncpa [#allocation4], 1
    %s461 = scalar_lea.sflag [#allocation4], 1
    %462 = vsyncpa %s461, 1

</llo_original>
